<compile_context>
chip_gen: v7x
topology: tpu7x:2x2x1
jax: 0.10.0
libtpu: 0.0.40
codegen_flags: <defaults>
</compile_context>

<pallas_src>
import jax
import jax.numpy as jnp
from jax.experimental import pallas as pl
from jax.experimental.pallas import tpu as pltpu

_LANE = 128           # vreg lane width: pad last dims to multiples of this
_SUBLANE_BF16 = 16    # bf16 packs 16 sublanes per vreg
_TM_CAP = 1024        # max rows per batch tile (x tile f32 = tm*in_dim*4 bytes)


def _round_up(x, m):
    return (x + m - 1) // m * m


def _mlp_kernel(x_ref,
                w1_ref, b1_ref,
                w2_ref, b2_ref,
                w3_ref, b3_ref,
                w4_ref, b4_ref,
                out_ref):
    # x arrives as f32 and is cast to bf16 in-kernel (no extra wrapper pass).
    # Weights are bf16 (MXU-native); accumulate in f32, do bias + ReLU on the
    # VPU in f32, and re-cast to bf16 between layers.  Output stored as bf16.
    x = x_ref[...].astype(jnp.bfloat16)

    h = jnp.dot(x, w1_ref[...], preferred_element_type=jnp.float32) + b1_ref[...]
    h = jnp.maximum(h, 0.0).astype(jnp.bfloat16)

    h = jnp.dot(h, w2_ref[...], preferred_element_type=jnp.float32) + b2_ref[...]
    h = jnp.maximum(h, 0.0).astype(jnp.bfloat16)

    h = jnp.dot(h, w3_ref[...], preferred_element_type=jnp.float32) + b3_ref[...]
    h = jnp.maximum(h, 0.0).astype(jnp.bfloat16)

    out = jnp.dot(h, w4_ref[...], preferred_element_type=jnp.float32) + b4_ref[...]
    out_ref[...] = out.astype(out_ref.dtype)


def _resident_spec(shape):
    # Full-extent block with a constant index_map: fetched once, stays in VMEM
    # for the whole batch grid.
    return pl.BlockSpec(shape, lambda i: (0,) * len(shape))


def batch_net_forward(x_nchw, params, out_dim):
    """Forward pass of Batch_Net.

    x_nchw : (B, C, H, W) f32 — flattened to (B, C*H*W) like x.view(B, -1).
    params : dict with w1..w4 (in, out_padded) bf16 and b1..b4 (1, out_padded)
             f32, already lane-padded (see init_params).
    out_dim: logical (unpadded) number of output classes.
    Returns (B, out_dim) f32 logits.
    """
    B = x_nchw.shape[0]
    x2d = x_nchw.reshape(B, -1)            # stays f32; cast to bf16 in-kernel
    in_dim = x2d.shape[1]
    assert in_dim == params["w1"].shape[0]

    d1 = params["w1"].shape[1]
    d2 = params["w2"].shape[1]
    d3 = params["w3"].shape[1]
    d4 = params["w4"].shape[1]   # lane-padded output width

    # Batch tiling: at least 2 grid steps (so "parallel" shards across both
    # v7x TensorCores; harmless on single-TC v5e/v6e), tiles up to _TM_CAP
    # rows to amortize the ~0.35 us per-grid-step overhead, and batch padding
    # bounded by one tile (never doubles the batch).
    n_tiles = max(2, -(-B // _TM_CAP))
    tm = _round_up(max(1, -(-B // n_tiles)), _SUBLANE_BF16)
    b_pad = tm * n_tiles
    if b_pad != B:
        x2d = jnp.pad(x2d, ((0, b_pad - B), (0, 0)))

    grid = (n_tiles,)

    in_specs = [
        pl.BlockSpec((tm, in_dim), lambda i: (i, 0)),
        _resident_spec(params["w1"].shape), _resident_spec(params["b1"].shape),
        _resident_spec(params["w2"].shape), _resident_spec(params["b2"].shape),
        _resident_spec(params["w3"].shape), _resident_spec(params["b3"].shape),
        _resident_spec(params["w4"].shape), _resident_spec(params["b4"].shape),
    ]
    out_specs = pl.BlockSpec((tm, d4), lambda i: (i, 0))

    flops = 2 * b_pad * (in_dim * d1 + d1 * d2 + d2 * d3 + d3 * d4)
    bytes_accessed = (
        b_pad * in_dim * 4                                            # x (f32 in)
        + sum(int(params[f"w{i}"].size) for i in range(1, 5)) * 2     # bf16 weights
        + sum(int(params[f"b{i}"].size) for i in range(1, 5)) * 4     # f32 biases
        + b_pad * d4 * 2)                                             # bf16 out
    cost = pl.CostEstimate(flops=flops, transcendentals=0,
                           bytes_accessed=bytes_accessed)

    out_padded = pl.pallas_call(
        _mlp_kernel,
        out_shape=jax.ShapeDtypeStruct((b_pad, d4), jnp.bfloat16),
        grid=grid,
        in_specs=in_specs,
        out_specs=out_specs,
        compiler_params=pltpu.CompilerParams(
            dimension_semantics=("parallel",),      # v7x: shard batch over 2 TCs
            vmem_limit_bytes=32 * 1024 * 1024),     # keep double-buffering on v7x
        cost_estimate=cost,
    )(
        x2d,
        params["w1"], params["b1"],
        params["w2"], params["b2"],
        params["w3"], params["b3"],
        params["w4"], params["b4"],
    )
    # Padded batch rows contain garbage logits; padded lane columns are exact
    # zeros. Slice both away; downstream consumers could instead mask and keep
    # the padded (b_pad, 128) bf16 block to avoid this extra pass.
    return out_padded[:B, :out_dim].astype(jnp.float32)


def init_params(key, in_dim, n_hidden_1, n_hidden_2, n_hidden_3, out_dim):
    """PyTorch-style uniform(+-1/sqrt(fan_in)) init.

    Weights stored transposed vs. PyTorch: (in, out), cast to bf16 for the MXU.
    Hidden/output widths are zero-padded to multiples of 128 lanes so every
    matmul output is lane-dense; padded columns/rows and biases are zero, so
    padded lanes stay exactly zero through bias-add and ReLU.
    Biases stay f32 (added after the f32 MXU accumulation).
    """
    p1 = _round_up(n_hidden_1, _LANE)
    p2 = _round_up(n_hidden_2, _LANE)
    p3 = _round_up(n_hidden_3, _LANE)
    p4 = _round_up(out_dim, _LANE)

    dims = [(in_dim, n_hidden_1),
            (n_hidden_1, n_hidden_2),
            (n_hidden_2, n_hidden_3),
            (n_hidden_3, out_dim)]
    padded_in = [in_dim, p1, p2, p3]
    padded_out = [p1, p2, p3, p4]

    params = {}
    for i, (fan_in, fan_out) in enumerate(dims, start=1):
        key, kw, kb = jax.random.split(key, 3)
        bound = 1.0 / float(fan_in) ** 0.5
        w = jax.random.uniform(kw, (fan_in, fan_out), jnp.float32,
                               minval=-bound, maxval=bound)
        b = jax.random.uniform(kb, (1, fan_out), jnp.float32,
                               minval=-bound, maxval=bound)
        pi, po = padded_in[i - 1], padded_out[i - 1]
        w = jnp.pad(w, ((0, pi - fan_in), (0, po - fan_out)))
        b = jnp.pad(b, ((0, 0), (0, po - fan_out)))
        params[f"w{i}"] = w.astype(jnp.bfloat16)
        params[f"b{i}"] = b
    return params


if __name__ == "__main__":
    # Small shapes consistent with the module's forward:
    # x: (batch=8, channels=1, 16, 16) -> in_dim = 256
    batch, C, H, W = 8, 1, 16, 16
    in_dim = C * H * W
    n_hidden_1, n_hidden_2, n_hidden_3, out_dim = 128, 128, 64, 10

    key = jax.random.PRNGKey(0)
    key, kx = jax.random.split(key)
    x = jax.random.normal(kx, (batch, C, H, W), dtype=jnp.float32)

    params = init_params(key, in_dim, n_hidden_1, n_hidden_2, n_hidden_3, out_dim)

    out = batch_net_forward(x, params, out_dim)
    out = jax.block_until_ready(out)
    assert out.shape == (batch, out_dim)

    # Pure-JAX reference mirroring the kernel math (in-kernel bf16 input cast,
    # bf16 matmuls, f32 accum, f32 bias/ReLU, bf16 output), sliced to the
    # unpadded output columns and cast back to f32.
    h = x.reshape(batch, -1).astype(jnp.bfloat16)
    ref = None
    for i in range(1, 5):
        acc = jnp.dot(h, params[f"w{i}"],
                      preferred_element_type=jnp.float32) + params[f"b{i}"]
        if i < 4:
            h = jnp.maximum(acc, 0.0).astype(jnp.bfloat16)
        else:
            ref = acc.astype(jnp.bfloat16).astype(jnp.float32)
    ref = ref[:, :out_dim]

    assert jnp.allclose(out, ref, atol=2e-2, rtol=2e-2), float(
        jnp.max(jnp.abs(out - ref)))

    print("KERNEL_OK")
</pallas_src>

<mosaic_0001>
module attributes {stable_mosaic.version = 11 : i64} {
  func.func @_mlp_kernel(%arg0: i32, %arg1: memref<16x256xf32, #tpu.memory_space<vmem>>, %arg2: memref<256x128xbf16, #tpu.memory_space<vmem>>, %arg3: memref<1x128xf32, #tpu.memory_space<vmem>>, %arg4: memref<128x128xbf16, #tpu.memory_space<vmem>>, %arg5: memref<1x128xf32, #tpu.memory_space<vmem>>, %arg6: memref<128x128xbf16, #tpu.memory_space<vmem>>, %arg7: memref<1x128xf32, #tpu.memory_space<vmem>>, %arg8: memref<128x128xbf16, #tpu.memory_space<vmem>>, %arg9: memref<1x128xf32, #tpu.memory_space<vmem>>, %arg10: memref<16x128xbf16, #tpu.memory_space<vmem>>) attributes {dimension_semantics = [#tpu.dimension_semantics<parallel>], iteration_bounds = array<i64: 2>, scalar_prefetch = 0 : i64, scratch_operands = 0 : i64, tpu.core_type = #tpu.core_type<tc>, window_params = [{transform_indices = @transform_0, window_bounds = array<i64: 16, 256>}, {pipeline_mode = #tpu.pipeline_mode<synchronous>, transform_indices = @transform_1, window_bounds = array<i64: 256, 128>}, {pipeline_mode = #tpu.pipeline_mode<synchronous>, transform_indices = @transform_2, window_bounds = array<i64: 1, 128>}, {pipeline_mode = #tpu.pipeline_mode<synchronous>, transform_indices = @transform_3, window_bounds = array<i64: 128, 128>}, {pipeline_mode = #tpu.pipeline_mode<synchronous>, transform_indices = @transform_4, window_bounds = array<i64: 1, 128>}, {pipeline_mode = #tpu.pipeline_mode<synchronous>, transform_indices = @transform_5, window_bounds = array<i64: 128, 128>}, {pipeline_mode = #tpu.pipeline_mode<synchronous>, transform_indices = @transform_6, window_bounds = array<i64: 1, 128>}, {pipeline_mode = #tpu.pipeline_mode<synchronous>, transform_indices = @transform_7, window_bounds = array<i64: 128, 128>}, {pipeline_mode = #tpu.pipeline_mode<synchronous>, transform_indices = @transform_8, window_bounds = array<i64: 1, 128>}, {transform_indices = @transform_9, window_bounds = array<i64: 16, 128>}]} {
    %c0 = arith.constant 0 : index
    %c0_0 = arith.constant 0 : index
    %0 = vector.load %arg1[%c0, %c0_0] : memref<16x256xf32, #tpu.memory_space<vmem>>, vector<16x256xf32>
    %1 = arith.truncf %0 : vector<16x256xf32> to vector<16x256xbf16>
    %c0_1 = arith.constant 0 : index
    %c0_2 = arith.constant 0 : index
    %2 = vector.load %arg2[%c0_1, %c0_2] : memref<256x128xbf16, #tpu.memory_space<vmem>>, vector<256x128xbf16>
    %cst = arith.constant dense<0.000000e+00> : vector<16x128xf32>
    %3 = tpu.matmul %1, %2, %cst {dimension_numbers = #tpu.dot_dimension_numbers<[1], [0], [0], [1], [0, 0, 1, 1], [], []>} : vector<16x256xbf16>, vector<256x128xbf16>, vector<16x128xf32> -> vector<16x128xf32>
    %c0_3 = arith.constant 0 : index
    %c0_4 = arith.constant 0 : index
    %4 = vector.load %arg3[%c0_3, %c0_4] : memref<1x128xf32, #tpu.memory_space<vmem>>, vector<1x128xf32>
    %5 = vector.broadcast %4 : vector<1x128xf32> to vector<16x128xf32>
    %6 = arith.addf %3, %5 : vector<16x128xf32>
    %cst_5 = arith.constant 0.000000e+00 : f32
    %7 = vector.broadcast %cst_5 : f32 to vector<16x128xf32>
    %8 = arith.maximumf %6, %7 : vector<16x128xf32>
    %9 = arith.truncf %8 : vector<16x128xf32> to vector<16x128xbf16>
    %c0_6 = arith.constant 0 : index
    %c0_7 = arith.constant 0 : index
    %10 = vector.load %arg4[%c0_6, %c0_7] : memref<128x128xbf16, #tpu.memory_space<vmem>>, vector<128x128xbf16>
    %cst_8 = arith.constant dense<0.000000e+00> : vector<16x128xf32>
    %11 = tpu.matmul %9, %10, %cst_8 {dimension_numbers = #tpu.dot_dimension_numbers<[1], [0], [0], [1], [0, 0, 1, 1], [], []>} : vector<16x128xbf16>, vector<128x128xbf16>, vector<16x128xf32> -> vector<16x128xf32>
    %c0_9 = arith.constant 0 : index
    %c0_10 = arith.constant 0 : index
    %12 = vector.load %arg5[%c0_9, %c0_10] : memref<1x128xf32, #tpu.memory_space<vmem>>, vector<1x128xf32>
    %13 = vector.broadcast %12 : vector<1x128xf32> to vector<16x128xf32>
    %14 = arith.addf %11, %13 : vector<16x128xf32>
    %cst_11 = arith.constant 0.000000e+00 : f32
    %15 = vector.broadcast %cst_11 : f32 to vector<16x128xf32>
    %16 = arith.maximumf %14, %15 : vector<16x128xf32>
    %17 = arith.truncf %16 : vector<16x128xf32> to vector<16x128xbf16>
    %c0_12 = arith.constant 0 : index
    %c0_13 = arith.constant 0 : index
    %18 = vector.load %arg6[%c0_12, %c0_13] : memref<128x128xbf16, #tpu.memory_space<vmem>>, vector<128x128xbf16>
    %cst_14 = arith.constant dense<0.000000e+00> : vector<16x128xf32>
    %19 = tpu.matmul %17, %18, %cst_14 {dimension_numbers = #tpu.dot_dimension_numbers<[1], [0], [0], [1], [0, 0, 1, 1], [], []>} : vector<16x128xbf16>, vector<128x128xbf16>, vector<16x128xf32> -> vector<16x128xf32>
    %c0_15 = arith.constant 0 : index
    %c0_16 = arith.constant 0 : index
    %20 = vector.load %arg7[%c0_15, %c0_16] : memref<1x128xf32, #tpu.memory_space<vmem>>, vector<1x128xf32>
    %21 = vector.broadcast %20 : vector<1x128xf32> to vector<16x128xf32>
    %22 = arith.addf %19, %21 : vector<16x128xf32>
    %cst_17 = arith.constant 0.000000e+00 : f32
    %23 = vector.broadcast %cst_17 : f32 to vector<16x128xf32>
    %24 = arith.maximumf %22, %23 : vector<16x128xf32>
    %25 = arith.truncf %24 : vector<16x128xf32> to vector<16x128xbf16>
    %c0_18 = arith.constant 0 : index
    %c0_19 = arith.constant 0 : index
    %26 = vector.load %arg8[%c0_18, %c0_19] : memref<128x128xbf16, #tpu.memory_space<vmem>>, vector<128x128xbf16>
    %cst_20 = arith.constant dense<0.000000e+00> : vector<16x128xf32>
    %27 = tpu.matmul %25, %26, %cst_20 {dimension_numbers = #tpu.dot_dimension_numbers<[1], [0], [0], [1], [0, 0, 1, 1], [], []>} : vector<16x128xbf16>, vector<128x128xbf16>, vector<16x128xf32> -> vector<16x128xf32>
    %c0_21 = arith.constant 0 : index
    %c0_22 = arith.constant 0 : index
    %28 = vector.load %arg9[%c0_21, %c0_22] : memref<1x128xf32, #tpu.memory_space<vmem>>, vector<1x128xf32>
    %29 = vector.broadcast %28 : vector<1x128xf32> to vector<16x128xf32>
    %30 = arith.addf %27, %29 : vector<16x128xf32>
    %31 = arith.truncf %30 : vector<16x128xf32> to vector<16x128xbf16>
    %c0_23 = arith.constant 0 : index
    %c0_24 = arith.constant 0 : index
    %32 = vector.load %arg10[%c0_23, %c0_24] : memref<16x128xbf16, #tpu.memory_space<vmem>>, vector<16x128xbf16>
    tpu.vector_store %arg10[%c0_23, %c0_24], %31 {strides = array<i32>} : memref<16x128xbf16, #tpu.memory_space<vmem>>, vector<16x128xbf16>,
    return
  }
  func.func @transform_0(%arg0: i32) -> (i32, i32) {
    %c0_i32 = arith.constant 0 : i32
    %c0_i32_0 = arith.constant 0 : i32
    return %arg0, %c0_i32 : i32, i32
  }
  func.func @transform_1(%arg0: i32) -> (i32, i32) {
    %c0_i32 = arith.constant 0 : i32
    %c0_i32_0 = arith.constant 0 : i32
    %c0_i32_1 = arith.constant 0 : i32
    return %c0_i32, %c0_i32_0 : i32, i32
  }
  func.func @transform_2(%arg0: i32) -> (i32, i32) {
    %c0_i32 = arith.constant 0 : i32
    %c0_i32_0 = arith.constant 0 : i32
    %c0_i32_1 = arith.constant 0 : i32
    return %c0_i32, %c0_i32_0 : i32, i32
  }
  func.func @transform_3(%arg0: i32) -> (i32, i32) {
    %c0_i32 = arith.constant 0 : i32
    %c0_i32_0 = arith.constant 0 : i32
    %c0_i32_1 = arith.constant 0 : i32
    return %c0_i32, %c0_i32_0 : i32, i32
  }
  func.func @transform_4(%arg0: i32) -> (i32, i32) {
    %c0_i32 = arith.constant 0 : i32
    %c0_i32_0 = arith.constant 0 : i32
    %c0_i32_1 = arith.constant 0 : i32
    return %c0_i32, %c0_i32_0 : i32, i32
  }
  func.func @transform_5(%arg0: i32) -> (i32, i32) {
    %c0_i32 = arith.constant 0 : i32
    %c0_i32_0 = arith.constant 0 : i32
    %c0_i32_1 = arith.constant 0 : i32
    return %c0_i32, %c0_i32_0 : i32, i32
  }
  func.func @transform_6(%arg0: i32) -> (i32, i32) {
    %c0_i32 = arith.constant 0 : i32
    %c0_i32_0 = arith.constant 0 : i32
    %c0_i32_1 = arith.constant 0 : i32
    return %c0_i32, %c0_i32_0 : i32, i32
  }
  func.func @transform_7(%arg0: i32) -> (i32, i32) {
    %c0_i32 = arith.constant 0 : i32
    %c0_i32_0 = arith.constant 0 : i32
    %c0_i32_1 = arith.constant 0 : i32
    return %c0_i32, %c0_i32_0 : i32, i32
  }
  func.func @transform_8(%arg0: i32) -> (i32, i32) {
    %c0_i32 = arith.constant 0 : i32
    %c0_i32_0 = arith.constant 0 : i32
    %c0_i32_1 = arith.constant 0 : i32
    return %c0_i32, %c0_i32_0 : i32, i32
  }
  func.func @transform_9(%arg0: i32) -> (i32, i32) {
    %c0_i32 = arith.constant 0 : i32
    %c0_i32_0 = arith.constant 0 : i32
    return %arg0, %c0_i32 : i32, i32
  }
}

</mosaic_0001>

<llo_original>
// kernel: tpu_custom_call.1
$region0: #{tpu_custom_call.1}
  #allocation0 [shape = 'u32[]', space=smem, size = 0x4, offset = 0x4, fixed_abs, tag = 'smem constant byte address 0x4 - core index']
  #allocation1 [shape = 'u32[144,128]{1,0:T(1,128)}', space=vmem, size = 0x12000, scoped, tag = 'internal scratch']
  %s0 = inlined_call_operand.hbm [shape: f32[32,256], index: 0, kind: input, shape index: {}]
  %s1 = inlined_call_operand.hbm [shape: bf16[256,128], index: 1, kind: input, shape index: {}]
  %s2 = inlined_call_operand.vmem [shape: f32[1,128], index: 2, kind: input, shape index: {}]
  %s3 = inlined_call_operand.hbm [shape: bf16[128,128], index: 3, kind: input, shape index: {}]
  %s4 = inlined_call_operand.vmem [shape: f32[1,128], index: 4, kind: input, shape index: {}]
  %s5 = inlined_call_operand.hbm [shape: bf16[128,128], index: 5, kind: input, shape index: {}]
  %s6 = inlined_call_operand.vmem [shape: f32[1,128], index: 6, kind: input, shape index: {}]
  %s7 = inlined_call_operand.hbm [shape: bf16[128,128], index: 7, kind: input, shape index: {}]
  %s8 = inlined_call_operand.vmem [shape: f32[1,128], index: 8, kind: input, shape index: {}]
  %s9 = inlined_call_operand.hbm [shape: bf16[32,128], index: 9, kind: output, shape index: {}]
  %s10 = sld [smem:[#allocation0]]
  $region89: #{tpu_custom_call.1} parent=0
    _
  %s12 = ssub.s32 1, %s10
  %s13 = scalar_select 0, %s12, %s10
  $region1: #{tpu_custom_call.1} parent=0
    #allocation2 [shape = 'u8[32768]{0}', space=vmem, size = 0x8000, scoped, tag = 'input window, operand 0']
    #allocation3 [shape = 's32[2]{0}', space=sflag, size = 0x8, scoped, tag = 'scoped memory for tpu_custom_call.1']
    #allocation4 [shape = 's32[2]{0}', space=sflag, size = 0x8, scoped, tag = 'scoped memory for tpu_custom_call.1']
    #allocation5 [shape = 'u8[65536]{0}', space=vmem, size = 0x10000, scoped, tag = 'input window, operand 1, single buffered']
    #allocation6 [shape = 's32[1]{0}', space=sflag, size = 0x4, scoped, tag = 'scoped memory for tpu_custom_call.1']
    #allocation7 [shape = 'u8[32768]{0}', space=vmem, size = 0x8000, scoped, tag = 'input window, operand 3, single buffered']
    #allocation8 [shape = 'u8[32768]{0}', space=vmem, size = 0x8000, scoped, tag = 'input window, operand 5, single buffered']
    #allocation9 [shape = 's32[1]{0}', space=sflag, size = 0x4, scoped, tag = 'scoped memory for tpu_custom_call.1']
    #allocation10 [shape = 'u8[32768]{0}', space=vmem, size = 0x8000, scoped, tag = 'input window, operand 7, single buffered']
    #allocation11 [shape = 'u8[8192]{0}', space=vmem, size = 0x2000, scoped, tag = 'output window, operand 0']
    %14 = vsyncpa [#allocation3], 0
    %s15 = scalar_lea.sflag [#allocation3], 1
    %16 = vsyncpa %s15, 0
    %17 = vsyncpa [#allocation6], 0
    %18 = vsyncpa [#allocation9], 0
    %19 = vsyncpa [#allocation4], 0
    %s20 = scalar_lea.sflag [#allocation4], 1
    %21 = vsyncpa %s20, 0
    loop: start=0, step=1, limit=4
    $region2: #{tpu_custom_call.1} parent=1 // loop_pre_header
      _
    $region3: #{tpu_custom_call.1} parent=1 // loop_header
      %s23 = sphi 0, %s27
      %p24 = scmp.ge.s32.totalorder %s23, 4
      %s33 = sphi 0, %s35
      %s36 = sphi 0, %s33
      %s37 = sphi 0, %s36
      %s53 = sphi 0, %s37
      %s57 = sphi 0, %s57
      %s59 = sphi 0, %s57
      %s60 = sphi 0, %s59
      %s74 = sphi 0, %s60
      %s78 = sphi 0, %s78
      %s80 = sphi 0, %s78
      %s81 = sphi 0, %s80
      %s95 = sphi 0, %s81
      %s99 = sphi 0, %s99
      %s101 = sphi 0, %s99
      %s102 = sphi 0, %s101
      %s116 = sphi 0, %s102
      %s120 = sphi 0, %s120
      %s122 = sphi 0, %s120
      %s123 = sphi 0, %s122
      %s137 = sphi 0, %s123
      %s141 = sphi 0, %s141
      %s143 = sphi 0, %s141
      %s144 = sphi 0, %s143
      %s158 = sphi 0, %s144
      %s162 = sphi 0, %s162
      %s164 = sphi 0, %s162
      %s165 = sphi 0, %s164
      %s179 = sphi 0, %s165
      %s183 = sphi 0, %s183
      %s185 = sphi 0, %s183
      %s186 = sphi 0, %s185
      %s200 = sphi 0, %s186
      %s204 = sphi 0, %s204
      %s206 = sphi 0, %s204
      %s207 = sphi 0, %s206
      %s221 = sphi 0, %s207
      %s227 = sphi 0, %s229
      %s230 = sphi 0, %s227
      %s231 = sphi 0, %s230
      %s247 = sphi 0, %s231
    $region4: #{tpu_custom_call.1} parent=1 // loop_header_branch
      %26 = sbr.rel (%p24) target = $region8
    $region5: #{tpu_custom_call.1} parent=1 // loop_body
      %s28 = ssub.s32 %s23, 1
      %s29 = ssub.s32 %s23, 2
      %s30 = sadd.s32 %s23, 1
      %s31 = ssub.s32 %s23, %s30
      %p32 = scmp.eq.s32.totalorder %s31, 0
      %s34 = sadd.s32 %s33, 1
      %s35 = scalar_select %p32, %s33, %s34
      %p38 = pneg %p32
      %p39 = scmp.eq.s32.totalorder %s23, 1
      %p40 = por %p38, %p39
      %p41 = scmp.ne.s32.totalorder %s33, %s36
      %p42 = scmp.eq.s32.totalorder %s23, 0
      %p43 = por %p41, %p42
      %p44 = scmp.ne.s32.totalorder %s33, %s36
      %p45 = scmp.eq.s32.totalorder %s28, 1
      %p46 = por %p44, %p45
      %p47 = scmp.ne.s32.totalorder %s36, %s37
      %p48 = scmp.eq.s32.totalorder %s28, 0
      %p49 = por %p47, %p48
      %p50 = scmp.ne.s32.totalorder %s36, %s37
      %p51 = scmp.eq.s32.totalorder %s29, 1
      %p52 = por %p50, %p51
      %p54 = scmp.ne.s32.totalorder %s37, %s53
      %p55 = scmp.eq.s32.totalorder %s29, 0
      %p56 = por %p54, %p55
      %s58 = sadd.s32 %s57, 1
      %p61 = scmp.eq.s32.totalorder %s23, 1
      %p62 = scmp.ne.s32.totalorder %s57, %s59
      %p63 = scmp.eq.s32.totalorder %s23, 0
      %p64 = por %p62, %p63
      %p65 = scmp.ne.s32.totalorder %s57, %s59
      %p66 = scmp.eq.s32.totalorder %s28, 1
      %p67 = por %p65, %p66
      %p68 = scmp.ne.s32.totalorder %s59, %s60
      %p69 = scmp.eq.s32.totalorder %s28, 0
      %p70 = por %p68, %p69
      %p71 = scmp.ne.s32.totalorder %s59, %s60
      %p72 = scmp.eq.s32.totalorder %s29, 1
      %p73 = por %p71, %p72
      %p75 = scmp.ne.s32.totalorder %s60, %s74
      %p76 = scmp.eq.s32.totalorder %s29, 0
      %p77 = por %p75, %p76
      %s79 = sadd.s32 %s78, 1
      %p82 = scmp.eq.s32.totalorder %s23, 1
      %p83 = scmp.ne.s32.totalorder %s78, %s80
      %p84 = scmp.eq.s32.totalorder %s23, 0
      %p85 = por %p83, %p84
      %p86 = scmp.ne.s32.totalorder %s78, %s80
      %p87 = scmp.eq.s32.totalorder %s28, 1
      %p88 = por %p86, %p87
      %p89 = scmp.ne.s32.totalorder %s80, %s81
      %p90 = scmp.eq.s32.totalorder %s28, 0
      %p91 = por %p89, %p90
      %p92 = scmp.ne.s32.totalorder %s80, %s81
      %p93 = scmp.eq.s32.totalorder %s29, 1
      %p94 = por %p92, %p93
      %p96 = scmp.ne.s32.totalorder %s81, %s95
      %p97 = scmp.eq.s32.totalorder %s29, 0
      %p98 = por %p96, %p97
      %s100 = sadd.s32 %s99, 1
      %p103 = scmp.eq.s32.totalorder %s23, 1
      %p104 = scmp.ne.s32.totalorder %s99, %s101
      %p105 = scmp.eq.s32.totalorder %s23, 0
      %p106 = por %p104, %p105
      %p107 = scmp.ne.s32.totalorder %s99, %s101
      %p108 = scmp.eq.s32.totalorder %s28, 1
      %p109 = por %p107, %p108
      %p110 = scmp.ne.s32.totalorder %s101, %s102
      %p111 = scmp.eq.s32.totalorder %s28, 0
      %p112 = por %p110, %p111
      %p113 = scmp.ne.s32.totalorder %s101, %s102
      %p114 = scmp.eq.s32.totalorder %s29, 1
      %p115 = por %p113, %p114
      %p117 = scmp.ne.s32.totalorder %s102, %s116
      %p118 = scmp.eq.s32.totalorder %s29, 0
      %p119 = por %p117, %p118
      %s121 = sadd.s32 %s120, 1
      %p124 = scmp.eq.s32.totalorder %s23, 1
      %p125 = scmp.ne.s32.totalorder %s120, %s122
      %p126 = scmp.eq.s32.totalorder %s23, 0
      %p127 = por %p125, %p126
      %p128 = scmp.ne.s32.totalorder %s120, %s122
      %p129 = scmp.eq.s32.totalorder %s28, 1
      %p130 = por %p128, %p129
      %p131 = scmp.ne.s32.totalorder %s122, %s123
      %p132 = scmp.eq.s32.totalorder %s28, 0
      %p133 = por %p131, %p132
      %p134 = scmp.ne.s32.totalorder %s122, %s123
      %p135 = scmp.eq.s32.totalorder %s29, 1
      %p136 = por %p134, %p135
      %p138 = scmp.ne.s32.totalorder %s123, %s137
      %p139 = scmp.eq.s32.totalorder %s29, 0
      %p140 = por %p138, %p139
      %s142 = sadd.s32 %s141, 1
      %p145 = scmp.eq.s32.totalorder %s23, 1
      %p146 = scmp.ne.s32.totalorder %s141, %s143
      %p147 = scmp.eq.s32.totalorder %s23, 0
      %p148 = por %p146, %p147
      %p149 = scmp.ne.s32.totalorder %s141, %s143
      %p150 = scmp.eq.s32.totalorder %s28, 1
      %p151 = por %p149, %p150
      %p152 = scmp.ne.s32.totalorder %s143, %s144
      %p153 = scmp.eq.s32.totalorder %s28, 0
      %p154 = por %p152, %p153
      %p155 = scmp.ne.s32.totalorder %s143, %s144
      %p156 = scmp.eq.s32.totalorder %s29, 1
      %p157 = por %p155, %p156
      %p159 = scmp.ne.s32.totalorder %s144, %s158
      %p160 = scmp.eq.s32.totalorder %s29, 0
      %p161 = por %p159, %p160
      %s163 = sadd.s32 %s162, 1
      %p166 = scmp.eq.s32.totalorder %s23, 1
      %p167 = scmp.ne.s32.totalorder %s162, %s164
      %p168 = scmp.eq.s32.totalorder %s23, 0
      %p169 = por %p167, %p168
      %p170 = scmp.ne.s32.totalorder %s162, %s164
      %p171 = scmp.eq.s32.totalorder %s28, 1
      %p172 = por %p170, %p171
      %p173 = scmp.ne.s32.totalorder %s164, %s165
      %p174 = scmp.eq.s32.totalorder %s28, 0
      %p175 = por %p173, %p174
      %p176 = scmp.ne.s32.totalorder %s164, %s165
      %p177 = scmp.eq.s32.totalorder %s29, 1
      %p178 = por %p176, %p177
      %p180 = scmp.ne.s32.totalorder %s165, %s179
      %p181 = scmp.eq.s32.totalorder %s29, 0
      %p182 = por %p180, %p181
      %s184 = sadd.s32 %s183, 1
      %p187 = scmp.eq.s32.totalorder %s23, 1
      %p188 = scmp.ne.s32.totalorder %s183, %s185
      %p189 = scmp.eq.s32.totalorder %s23, 0
      %p190 = por %p188, %p189
      %p191 = scmp.ne.s32.totalorder %s183, %s185
      %p192 = scmp.eq.s32.totalorder %s28, 1
      %p193 = por %p191, %p192
      %p194 = scmp.ne.s32.totalorder %s185, %s186
      %p195 = scmp.eq.s32.totalorder %s28, 0
      %p196 = por %p194, %p195
      %p197 = scmp.ne.s32.totalorder %s185, %s186
      %p198 = scmp.eq.s32.totalorder %s29, 1
      %p199 = por %p197, %p198
      %p201 = scmp.ne.s32.totalorder %s186, %s200
      %p202 = scmp.eq.s32.totalorder %s29, 0
      %p203 = por %p201, %p202
      %s205 = sadd.s32 %s204, 1
      %p208 = scmp.eq.s32.totalorder %s23, 1
      %p209 = scmp.ne.s32.totalorder %s204, %s206
      %p210 = scmp.eq.s32.totalorder %s23, 0
      %p211 = por %p209, %p210
      %p212 = scmp.ne.s32.totalorder %s204, %s206
      %p213 = scmp.eq.s32.totalorder %s28, 1
      %p214 = por %p212, %p213
      %p215 = scmp.ne.s32.totalorder %s206, %s207
      %p216 = scmp.eq.s32.totalorder %s28, 0
      %p217 = por %p215, %p216
      %p218 = scmp.ne.s32.totalorder %s206, %s207
      %p219 = scmp.eq.s32.totalorder %s29, 1
      %p220 = por %p218, %p219
      %p222 = scmp.ne.s32.totalorder %s207, %s221
      %p223 = scmp.eq.s32.totalorder %s29, 0
      %p224 = por %p222, %p223
      %s225 = ssub.s32 %s23, %s30
      %p226 = scmp.eq.s32.totalorder %s225, 0
      %s228 = sadd.s32 %s227, 1
      %s229 = scalar_select %p226, %s227, %s228
      %p232 = pneg %p226
      %p233 = scmp.eq.s32.totalorder %s23, 1
      %p234 = por %p232, %p233
      %p235 = scmp.ne.s32.totalorder %s227, %s230
      %p236 = scmp.eq.s32.totalorder %s23, 0
      %p237 = por %p235, %p236
      %p238 = scmp.ne.s32.totalorder %s227, %s230
      %p239 = scmp.eq.s32.totalorder %s28, 1
      %p240 = por %p238, %p239
      %p241 = scmp.ne.s32.totalorder %s230, %s231
      %p242 = scmp.eq.s32.totalorder %s28, 0
      %p243 = por %p241, %p242
      %p244 = scmp.ne.s32.totalorder %s230, %s231
      %p245 = scmp.eq.s32.totalorder %s29, 1
      %p246 = por %p244, %p245
      %p248 = scmp.ne.s32.totalorder %s231, %s247
      %p249 = scmp.eq.s32.totalorder %s29, 0
      %p250 = por %p248, %p249
      %p251 = scmp.le.s32.totalorder 1, %s23
      %p252 = scmp.lt.s32.totalorder %s23, 3
      %p253 = pnand %p251, %p252
      %p254 = pneg %p253
      // Predicated region
      $region9: #{tpu_custom_call.1} parent=5 // pred_check
        _
      $region10: #{tpu_custom_call.1} parent=5 // pred_check_branch
        %256 = sbr.rel (%p253) target = $region12
      $region11: #{tpu_custom_call.1} parent=5 // pred_region
        %s257 = ssub.s32 %s23, 1
        // Predicated region
        $region13: #{tpu_custom_call.1} parent=11 // pred_check
          %p258 = pneg %p70
        $region14: #{tpu_custom_call.1} parent=11 // pred_check_branch
          %260 = sbr.rel (%p258) target = $region16
        $region15: #{tpu_custom_call.1} parent=11 // pred_region
          %s262 = ssub.s32 2048, 2048
          %263 = vsyncadd [#allocation6], %s262
          %s264 = sshll.u32 [#allocation5], 4
          %s265 = int_to_ptr.vmem [resolvable:$true] %s264
          %270 = dma.hbm_to_vmem [thread:$0]  %s1, 2048, %s265, [#allocation6], 64, 64, 4
        $region16: #{tpu_custom_call.1} parent=11 // pred_fallthru
          _
        // Predicated region
        $region17: #{tpu_custom_call.1} parent=11 // pred_check
          %p271 = pneg %p91
        $region18: #{tpu_custom_call.1} parent=11 // pred_check_branch
          %273 = sbr.rel (%p271) target = $region20
        $region19: #{tpu_custom_call.1} parent=11 // pred_region
          _
        $region20: #{tpu_custom_call.1} parent=11 // pred_fallthru
          _
        // Predicated region
        $region21: #{tpu_custom_call.1} parent=11 // pred_check
          %p274 = pneg %p112
        $region22: #{tpu_custom_call.1} parent=11 // pred_check_branch
          %276 = sbr.rel (%p274) target = $region24
        $region23: #{tpu_custom_call.1} parent=11 // pred_region
          %s278 = ssub.s32 1024, 1024
          %279 = vsyncadd [#allocation6], %s278
          %s280 = sshll.u32 [#allocation7], 4
          %s281 = int_to_ptr.vmem [resolvable:$true] %s280
          %286 = dma.hbm_to_vmem [thread:$0]  %s3, 1024, %s281, [#allocation6], 64, 64, 4
        $region24: #{tpu_custom_call.1} parent=11 // pred_fallthru
          _
        // Predicated region
        $region25: #{tpu_custom_call.1} parent=11 // pred_check
          %p287 = pneg %p133
        $region26: #{tpu_custom_call.1} parent=11 // pred_check_branch
          %289 = sbr.rel (%p287) target = $region28
        $region27: #{tpu_custom_call.1} parent=11 // pred_region
          _
        $region28: #{tpu_custom_call.1} parent=11 // pred_fallthru
          _
        // Predicated region
        $region29: #{tpu_custom_call.1} parent=11 // pred_check
          %p290 = pneg %p154
        $region30: #{tpu_custom_call.1} parent=11 // pred_check_branch
          %292 = sbr.rel (%p290) target = $region32
        $region31: #{tpu_custom_call.1} parent=11 // pred_region
          %s294 = ssub.s32 1024, 1024
          %295 = vsyncadd [#allocation9], %s294
          %s296 = sshll.u32 [#allocation8], 4
          %s297 = int_to_ptr.vmem [resolvable:$true] %s296
          %302 = dma.hbm_to_vmem [thread:$0]  %s5, 1024, %s297, [#allocation9], 64, 64, 4
        $region32: #{tpu_custom_call.1} parent=11 // pred_fallthru
          _
        // Predicated region
        $region33: #{tpu_custom_call.1} parent=11 // pred_check
          %p303 = pneg %p175
        $region34: #{tpu_custom_call.1} parent=11 // pred_check_branch
          %305 = sbr.rel (%p303) target = $region36
        $region35: #{tpu_custom_call.1} parent=11 // pred_region
          _
        $region36: #{tpu_custom_call.1} parent=11 // pred_fallthru
          _
        // Predicated region
        $region37: #{tpu_custom_call.1} parent=11 // pred_check
          %p306 = pneg %p196
        $region38: #{tpu_custom_call.1} parent=11 // pred_check_branch
          %308 = sbr.rel (%p306) target = $region40
        $region39: #{tpu_custom_call.1} parent=11 // pred_region
          %s310 = ssub.s32 1024, 1024
          %311 = vsyncadd [#allocation9], %s310
          %s312 = sshll.u32 [#allocation10], 4
          %s313 = int_to_ptr.vmem [resolvable:$true] %s312
          %318 = dma.hbm_to_vmem [thread:$0]  %s7, 1024, %s313, [#allocation9], 64, 64, 4
        $region40: #{tpu_custom_call.1} parent=11 // pred_fallthru
          _
        // Predicated region
        $region41: #{tpu_custom_call.1} parent=11 // pred_check
          %p319 = pneg %p217
        $region42: #{tpu_custom_call.1} parent=11 // pred_check_branch
          %321 = sbr.rel (%p319) target = $region44
        $region43: #{tpu_custom_call.1} parent=11 // pred_region
          _
        $region44: #{tpu_custom_call.1} parent=11 // pred_fallthru
          _
      $region12: #{tpu_custom_call.1} parent=5 // pred_fallthru
        _
      %p322 = scmp.lt.s32.totalorder %s23, 2
      // Predicated region
      $region45: #{tpu_custom_call.1} parent=5 // pred_check
        %p323 = pneg %p322
      $region46: #{tpu_custom_call.1} parent=5 // pred_check_branch
        %325 = sbr.rel (%p323) target = $region48
      $region47: #{tpu_custom_call.1} parent=5 // pred_region
        // Predicated region
        $region49: #{tpu_custom_call.1} parent=47 // pred_check
          %p326 = pneg %p43
        $region50: #{tpu_custom_call.1} parent=47 // pred_check_branch
          %328 = sbr.rel (%p326) target = $region52
        $region51: #{tpu_custom_call.1} parent=47 // pred_region
          %s329 = sand.u32 %s33, 1
          %s330 = scalar_lea.sflag [#allocation3], %s329
          %s331 = sand.u32 %s33, 1
          %s332 = smul.addr %s331, 32
          %s333 = scalar_lea.vmem [#allocation2], %s332
          %s334 = smul.u32 2, %s23
          %s336 = ssub.s32 512, 512
          %337 = vsyncadd %s330, %s336
          %s338 = smul.addr %s334, 2
          %s339 = smul.addr %s338, 128
          %s340 = scalar_lea.hbm %s0, %s339
          %s341 = sshll.u32 %s333, 4
          %s342 = int_to_ptr.vmem [resolvable:$true] %s341
          %347 = dma.hbm_to_vmem [thread:$0]  %s340, 512, %s342, %s330, 256, 256, 16
        $region52: #{tpu_custom_call.1} parent=47 // pred_fallthru
          _
      $region48: #{tpu_custom_call.1} parent=5 // pred_fallthru
        _
      %p348 = scmp.le.s32.totalorder 1, %s23
      %p349 = scmp.lt.s32.totalorder %s23, 3
      %p350 = pnand %p348, %p349
      %p351 = pneg %p350
      // Predicated region
      $region53: #{tpu_custom_call.1} parent=5 // pred_check
        _
      $region54: #{tpu_custom_call.1} parent=5 // pred_check_branch
        %353 = sbr.rel (%p350) target = $region56
      $region55: #{tpu_custom_call.1} parent=5 // pred_region
        %s354 = ssub.s32 %s23, 1
        %s355 = sand.u32 %s36, 1
        %s356 = scalar_lea.sflag [#allocation3], %s355
        %s357 = sand.u32 %s36, 1
        %s358 = smul.addr %s357, 32
        %s359 = scalar_lea.vmem [#allocation2], %s358
        // Predicated region
        $region57: #{tpu_custom_call.1} parent=55 // pred_check
          %p360 = pneg %p49
        $region58: #{tpu_custom_call.1} parent=55 // pred_check_branch
          %362 = sbr.rel (%p360) target = $region60
        $region59: #{tpu_custom_call.1} parent=55 // pred_region
          %363 = dma.done %s356, 512
        $region60: #{tpu_custom_call.1} parent=55 // pred_fallthru
          _
        // Predicated region
        $region61: #{tpu_custom_call.1} parent=55 // pred_check
          %p364 = pneg %p70
        $region62: #{tpu_custom_call.1} parent=55 // pred_check_branch
          %366 = sbr.rel (%p364) target = $region64
        $region63: #{tpu_custom_call.1} parent=55 // pred_region
          %367 = dma.done [#allocation6], 2048
        $region64: #{tpu_custom_call.1} parent=55 // pred_fallthru
          _
        // Predicated region
        $region65: #{tpu_custom_call.1} parent=55 // pred_check
          %p368 = pneg %p112
        $region66: #{tpu_custom_call.1} parent=55 // pred_check_branch
          %370 = sbr.rel (%p368) target = $region68
        $region67: #{tpu_custom_call.1} parent=55 // pred_region
          %371 = dma.done [#allocation6], 1024
        $region68: #{tpu_custom_call.1} parent=55 // pred_fallthru
          _
        // Predicated region
        $region69: #{tpu_custom_call.1} parent=55 // pred_check
          %p372 = pneg %p154
        $region70: #{tpu_custom_call.1} parent=55 // pred_check_branch
          %374 = sbr.rel (%p372) target = $region72
        $region71: #{tpu_custom_call.1} parent=55 // pred_region
          %375 = dma.done [#allocation9], 1024
        $region72: #{tpu_custom_call.1} parent=55 // pred_fallthru
          _
        // Predicated region
        $region73: #{tpu_custom_call.1} parent=55 // pred_check
          %p376 = pneg %p196
        $region74: #{tpu_custom_call.1} parent=55 // pred_check_branch
          %378 = sbr.rel (%p376) target = $region76
        $region75: #{tpu_custom_call.1} parent=55 // pred_region
          %379 = dma.done [#allocation9], 1024
        $region76: #{tpu_custom_call.1} parent=55 // pred_fallthru
          _
        %s380 = sand.u32 %s36, 1
        %s381 = scalar_lea.sflag [#allocation3], %s380
        %s382 = sand.u32 %s36, 1
        %s383 = smul.addr %s382, 32
        %s384 = scalar_lea.vmem [#allocation2], %s383
        %p385 = pneg %p49
        %p386 = pneg %p46
        %p387 = pneg %p70
        %p388 = pneg %p67
        %p389 = pneg %p91
        %p390 = pneg %p88
        %p391 = pneg %p112
        %p392 = pneg %p109
        %p393 = pneg %p133
        %p394 = pneg %p130
        %p395 = pneg %p154
        %p396 = pneg %p151
        %p397 = pneg %p175
        %p398 = pneg %p172
        %p399 = pneg %p196
        %p400 = pneg %p193
        %p401 = pneg %p217
        %p402 = pneg %p214
        %p403 = pneg %p243
        %p404 = pneg %p240
        %s405 = sand.u32 %s230, 1
        %s406 = scalar_lea.sflag [#allocation4], %s405
        %s407 = sand.u32 %s230, 1
        %s408 = smul.addr %s407, 8
        %s409 = scalar_lea.vmem [#allocation11], %s408
        %s410 = smul.u32 2, %s28
        %s411 = smul.u32 2, %s28
        %v413 = vld [vmem:[%s359] sm:$0xff]
        %v414 = vld [vmem:[%s359 + $0x8] sm:$0xff]
        %v415 = vld [vmem:[%s359 + $0x10] sm:$0xff]
        %v416 = vld [vmem:[%s359 + $0x18] sm:$0xff]
        %v417 = vpack.c.bf16 %v415, %v413
        %v418 = vpack.c.bf16 %v416, %v414
        %v419 = vld [vmem:[#allocation5] sm:$0xf]
        %v420 = vld [vmem:[#allocation5 + $0x4] sm:$0xf]
        %v421 = vld [vmem:[#allocation5 + $0x8] sm:$0xf]
        %v422 = vld [vmem:[#allocation5 + $0xc] sm:$0xf]
        %v423 = vld [vmem:[#allocation5 + $0x10] sm:$0xf]
        %v424 = vld [vmem:[#allocation5 + $0x14] sm:$0xf]
        %v425 = vld [vmem:[#allocation5 + $0x18] sm:$0xf]
        %v426 = vld [vmem:[#allocation5 + $0x1c] sm:$0xf]
        %v427 = vld [vmem:[#allocation5 + $0x20] sm:$0xf]
        %v428 = vld [vmem:[#allocation5 + $0x24] sm:$0xf]
        %v429 = vld [vmem:[#allocation5 + $0x28] sm:$0xf]
        %v430 = vld [vmem:[#allocation5 + $0x2c] sm:$0xf]
        %v431 = vld [vmem:[#allocation5 + $0x30] sm:$0xf]
        %v432 = vld [vmem:[#allocation5 + $0x34] sm:$0xf]
        %v433 = vld [vmem:[#allocation5 + $0x38] sm:$0xf]
        %v434 = vld [vmem:[#allocation5 + $0x3c] sm:$0xf]
        %v435 = vld [vmem:[#allocation5 + $0x40] sm:$0xf]
        %v436 = vld [vmem:[#allocation5 + $0x44] sm:$0xf]
        %v437 = vld [vmem:[#allocation5 + $0x48] sm:$0xf]
        %v438 = vld [vmem:[#allocation5 + $0x4c] sm:$0xf]
        %v439 = vld [vmem:[#allocation5 + $0x50] sm:$0xf]
        %v440 = vld [vmem:[#allocation5 + $0x54] sm:$0xf]
        %v441 = vld [vmem:[#allocation5 + $0x58] sm:$0xf]
        %v442 = vld [vmem:[#allocation5 + $0x5c] sm:$0xf]
        %v443 = vld [vmem:[#allocation5 + $0x60] sm:$0xf]
        %v444 = vld [vmem:[#allocation5 + $0x64] sm:$0xf]
        %v445 = vld [vmem:[#allocation5 + $0x68] sm:$0xf]
        %v446 = vld [vmem:[#allocation5 + $0x6c] sm:$0xf]
        %v447 = vld [vmem:[#allocation5 + $0x70] sm:$0xf]
        %v448 = vld [vmem:[#allocation5 + $0x74] sm:$0xf]
        %v449 = vld [vmem:[#allocation5 + $0x78] sm:$0xf]
        %v450 = vld [vmem:[#allocation5 + $0x7c] sm:$0xf]
        %v451 = vld [vmem:[%s2] sm:$0x1]
        %v453 = vlaneseq
        %v454 = vshrl.u32 %v453, 7
        %v455 = vsub.s32 0, %v454
        %v456 = vrot.slane %v451, %v455
        %v490 = vunpack.c.l.b16 %v419
        %v491 = vunpack.c.l.b16 %v420
        %v492 = vunpack.c.l.b16 %v421
        %v493 = vunpack.c.l.b16 %v422
        %v494 = vunpack.c.l.b16 %v423
        %v495 = vunpack.c.l.b16 %v424
        %v496 = vunpack.c.l.b16 %v425
        %v497 = vunpack.c.l.b16 %v426
        %v498 = vunpack.c.l.b16 %v427
        %v499 = vunpack.c.l.b16 %v428
        %v500 = vunpack.c.l.b16 %v429
        %v501 = vunpack.c.l.b16 %v430
        %v502 = vunpack.c.l.b16 %v431
        %v503 = vunpack.c.l.b16 %v432
        %v504 = vunpack.c.l.b16 %v433
        %v505 = vunpack.c.l.b16 %v434
        %v506 = vunpack.c.l.b16 %v435
        %v507 = vunpack.c.l.b16 %v436
        %v508 = vunpack.c.l.b16 %v437
        %v509 = vunpack.c.l.b16 %v438
        %v510 = vunpack.c.l.b16 %v439
        %v511 = vunpack.c.l.b16 %v440
        %v512 = vunpack.c.l.b16 %v441
        %v513 = vunpack.c.l.b16 %v442
        %v514 = vunpack.c.l.b16 %v443
        %v515 = vunpack.c.l.b16 %v444
        %v516 = vunpack.c.l.b16 %v445
        %v517 = vunpack.c.l.b16 %v446
        %v518 = vunpack.c.l.b16 %v447
        %v519 = vunpack.c.l.b16 %v448
        %v520 = vunpack.c.l.b16 %v449
        %v521 = vunpack.c.l.b16 %v450
        %v522 = vpack.c.b16 %v491, %v490
        %v523 = vpack.c.b16 %v493, %v492
        %v524 = vpack.c.b16 %v495, %v494
        %v525 = vpack.c.b16 %v497, %v496
        %v526 = vpack.c.b16 %v499, %v498
        %v527 = vpack.c.b16 %v501, %v500
        %v528 = vpack.c.b16 %v503, %v502
        %v529 = vpack.c.b16 %v505, %v504
        %v530 = vpack.c.b16 %v507, %v506
        %v531 = vpack.c.b16 %v509, %v508
        %v532 = vpack.c.b16 %v511, %v510
        %v533 = vpack.c.b16 %v513, %v512
        %v534 = vpack.c.b16 %v515, %v514
        %v535 = vpack.c.b16 %v517, %v516
        %v536 = vpack.c.b16 %v519, %v518
        %v537 = vpack.c.b16 %v521, %v520
        %554 = vmatprep.subr.bf16.mxu0 0
        %555 = vmatpush1.bf16.msra.mxu0 %v522
        %556 = vmatprep.subr.bf16.mxu0 0
        %557 = vmatpush1.bf16.msra.mxu0 %v523
        %558 = vmatprep.subr.bf16.mxu0 0
        %559 = vmatpush1.bf16.msra.mxu0 %v524
        %560 = vmatprep.subr.bf16.mxu0 0
        %561 = vmatpush1.bf16.msra.mxu0 %v525
        %562 = vmatprep.subr.bf16.mxu0 0
        %563 = vmatpush1.bf16.msra.mxu0 %v526
        %564 = vmatprep.subr.bf16.mxu0 0
        %565 = vmatpush1.bf16.msra.mxu0 %v527
        %566 = vmatprep.subr.bf16.mxu0 0
        %567 = vmatpush1.bf16.msra.mxu0 %v528
        %568 = vmatprep.subr.bf16.mxu0 0
        %569 = vmatpush1.bf16.msra.mxu0 %v529
        %570 = vmatprep.subr.bf16.mxu0 0
        %571 = vmatpush1.bf16.msra.mxu0 %v530
        %572 = vmatprep.subr.bf16.mxu0 0
        %573 = vmatpush1.bf16.msra.mxu0 %v531
        %574 = vmatprep.subr.bf16.mxu0 0
        %575 = vmatpush1.bf16.msra.mxu0 %v532
        %576 = vmatprep.subr.bf16.mxu0 0
        %577 = vmatpush1.bf16.msra.mxu0 %v533
        %578 = vmatprep.subr.bf16.mxu0 0
        %579 = vmatpush1.bf16.msra.mxu0 %v534
        %580 = vmatprep.subr.bf16.mxu0 0
        %581 = vmatpush1.bf16.msra.mxu0 %v535
        %582 = vmatprep.subr.bf16.mxu0 0
        %583 = vmatpush1.bf16.msra.mxu0 %v536
        %584 = vmatprep.subr.bf16.mxu0 0
        %585 = vmatpush1.bf16.msra.mxu0 %v537
        %586 = vmatprep.mubr.bf16.mxu0 %v418
        %587 = vmatmul.mubr.bf16.gmra.mrb[0].mxu0 %v417
        %v588 = vpop.f32.mrb[0].mxu0
        %v589 = vadd.f32 %v456, %v588
        %v590 = vpop.f32.mrb[0].mxu0
        %v591 = vpop.f32.mrb[0].mxu0
        %v592 = vadd.f32 %v456, %v591
        %v593 = vpop.f32.mrb[0].mxu0
        %594 = vdwg.mxu0
        %v595 = vmax.f32 %v589, 0.0
        %v596 = vmax.f32 %v592, 0.0
        %v597 = vpack.c.bf16 %v596, %v595
        %v598 = vld [vmem:[#allocation7] sm:$0xf]
        %v599 = vld [vmem:[#allocation7 + $0x4] sm:$0xf]
        %v600 = vld [vmem:[#allocation7 + $0x8] sm:$0xf]
        %v601 = vld [vmem:[#allocation7 + $0xc] sm:$0xf]
        %v602 = vld [vmem:[#allocation7 + $0x10] sm:$0xf]
        %v603 = vld [vmem:[#allocation7 + $0x14] sm:$0xf]
        %v604 = vld [vmem:[#allocation7 + $0x18] sm:$0xf]
        %v605 = vld [vmem:[#allocation7 + $0x1c] sm:$0xf]
        %v606 = vld [vmem:[#allocation7 + $0x20] sm:$0xf]
        %v607 = vld [vmem:[#allocation7 + $0x24] sm:$0xf]
        %v608 = vld [vmem:[#allocation7 + $0x28] sm:$0xf]
        %v609 = vld [vmem:[#allocation7 + $0x2c] sm:$0xf]
        %v610 = vld [vmem:[#allocation7 + $0x30] sm:$0xf]
        %v611 = vld [vmem:[#allocation7 + $0x34] sm:$0xf]
        %v612 = vld [vmem:[#allocation7 + $0x38] sm:$0xf]
        %v613 = vld [vmem:[#allocation7 + $0x3c] sm:$0xf]
        %v614 = vld [vmem:[%s4] sm:$0x1]
        %v616 = vlaneseq
        %v617 = vshrl.u32 %v616, 7
        %v618 = vsub.s32 0, %v617
        %v619 = vrot.slane %v614, %v618
        %v637 = vunpack.c.l.b16 %v598
        %v638 = vunpack.c.l.b16 %v599
        %v639 = vunpack.c.l.b16 %v600
        %v640 = vunpack.c.l.b16 %v601
        %v641 = vunpack.c.l.b16 %v602
        %v642 = vunpack.c.l.b16 %v603
        %v643 = vunpack.c.l.b16 %v604
        %v644 = vunpack.c.l.b16 %v605
        %v645 = vunpack.c.l.b16 %v606
        %v646 = vunpack.c.l.b16 %v607
        %v647 = vunpack.c.l.b16 %v608
        %v648 = vunpack.c.l.b16 %v609
        %v649 = vunpack.c.l.b16 %v610
        %v650 = vunpack.c.l.b16 %v611
        %v651 = vunpack.c.l.b16 %v612
        %v652 = vunpack.c.l.b16 %v613
        %v653 = vpack.c.b16 %v638, %v637
        %v654 = vpack.c.b16 %v640, %v639
        %v655 = vpack.c.b16 %v642, %v641
        %v656 = vpack.c.b16 %v644, %v643
        %v657 = vpack.c.b16 %v646, %v645
        %v658 = vpack.c.b16 %v648, %v647
        %v659 = vpack.c.b16 %v650, %v649
        %v660 = vpack.c.b16 %v652, %v651
        %669 = vmatprep.subr.bf16.mxu0 0
        %670 = vmatpush1.bf16.msra.mxu0 %v653
        %671 = vmatprep.subr.bf16.mxu0 0
        %672 = vmatpush1.bf16.msra.mxu0 %v654
        %673 = vmatprep.subr.bf16.mxu0 0
        %674 = vmatpush1.bf16.msra.mxu0 %v655
        %675 = vmatprep.subr.bf16.mxu0 0
        %676 = vmatpush1.bf16.msra.mxu0 %v656
        %677 = vmatprep.subr.bf16.mxu0 0
        %678 = vmatpush1.bf16.msra.mxu0 %v657
        %679 = vmatprep.subr.bf16.mxu0 0
        %680 = vmatpush1.bf16.msra.mxu0 %v658
        %681 = vmatprep.subr.bf16.mxu0 0
        %682 = vmatpush1.bf16.msra.mxu0 %v659
        %683 = vmatprep.subr.bf16.mxu0 0
        %684 = vmatpush1.bf16.msra.mxu0 %v660
        %685 = vmatprep.subr.bf16.mxu0 0
        %686 = vmatpush1.bf16.msra.mxu0 0
        %687 = vmatprep.subr.bf16.mxu0 0
        %688 = vmatpush1.bf16.msra.mxu0 0
        %689 = vmatprep.subr.bf16.mxu0 0
        %690 = vmatpush1.bf16.msra.mxu0 0
        %691 = vmatprep.subr.bf16.mxu0 0
        %692 = vmatpush1.bf16.msra.mxu0 0
        %693 = vmatprep.subr.bf16.mxu0 0
        %694 = vmatpush1.bf16.msra.mxu0 0
        %695 = vmatprep.subr.bf16.mxu0 0
        %696 = vmatpush1.bf16.msra.mxu0 0
        %697 = vmatprep.subr.bf16.mxu0 0
        %698 = vmatpush1.bf16.msra.mxu0 0
        %699 = vmatprep.subr.bf16.mxu0 0
        %700 = vmatpush1.bf16.msra.mxu0 0
        %701 = vmatprep.mubr.bf16.mxu0 0
        %702 = vmatmul.mubr.bf16.gmra.mrb[0].mxu0 %v597
        %v703 = vpop.f32.mrb[0].mxu0
        %v704 = vadd.f32 %v619, %v703
        %v705 = vpop.f32.mrb[0].mxu0
        %v706 = vpop.f32.mrb[0].mxu0
        %v707 = vadd.f32 %v619, %v706
        %v708 = vpop.f32.mrb[0].mxu0
        %709 = vdwg.mxu0
        %v710 = vmax.f32 %v704, 0.0
        %v711 = vmax.f32 %v707, 0.0
        %v712 = vpack.c.bf16 %v711, %v710
        %v713 = vld [vmem:[#allocation8] sm:$0xf]
        %v714 = vld [vmem:[#allocation8 + $0x4] sm:$0xf]
        %v715 = vld [vmem:[#allocation8 + $0x8] sm:$0xf]
        %v716 = vld [vmem:[#allocation8 + $0xc] sm:$0xf]
        %v717 = vld [vmem:[#allocation8 + $0x10] sm:$0xf]
        %v718 = vld [vmem:[#allocation8 + $0x14] sm:$0xf]
        %v719 = vld [vmem:[#allocation8 + $0x18] sm:$0xf]
        %v720 = vld [vmem:[#allocation8 + $0x1c] sm:$0xf]
        %v721 = vld [vmem:[#allocation8 + $0x20] sm:$0xf]
        %v722 = vld [vmem:[#allocation8 + $0x24] sm:$0xf]
        %v723 = vld [vmem:[#allocation8 + $0x28] sm:$0xf]
        %v724 = vld [vmem:[#allocation8 + $0x2c] sm:$0xf]
        %v725 = vld [vmem:[#allocation8 + $0x30] sm:$0xf]
        %v726 = vld [vmem:[#allocation8 + $0x34] sm:$0xf]
        %v727 = vld [vmem:[#allocation8 + $0x38] sm:$0xf]
        %v728 = vld [vmem:[#allocation8 + $0x3c] sm:$0xf]
        %v729 = vld [vmem:[%s6] sm:$0x1]
        %v731 = vlaneseq
        %v732 = vshrl.u32 %v731, 7
        %v733 = vsub.s32 0, %v732
        %v734 = vrot.slane %v729, %v733
        %v752 = vunpack.c.l.b16 %v713
        %v753 = vunpack.c.l.b16 %v714
        %v754 = vunpack.c.l.b16 %v715
        %v755 = vunpack.c.l.b16 %v716
        %v756 = vunpack.c.l.b16 %v717
        %v757 = vunpack.c.l.b16 %v718
        %v758 = vunpack.c.l.b16 %v719
        %v759 = vunpack.c.l.b16 %v720
        %v760 = vunpack.c.l.b16 %v721
        %v761 = vunpack.c.l.b16 %v722
        %v762 = vunpack.c.l.b16 %v723
        %v763 = vunpack.c.l.b16 %v724
        %v764 = vunpack.c.l.b16 %v725
        %v765 = vunpack.c.l.b16 %v726
        %v766 = vunpack.c.l.b16 %v727
        %v767 = vunpack.c.l.b16 %v728
        %v768 = vpack.c.b16 %v753, %v752
        %v769 = vpack.c.b16 %v755, %v754
        %v770 = vpack.c.b16 %v757, %v756
        %v771 = vpack.c.b16 %v759, %v758
        %v772 = vpack.c.b16 %v761, %v760
        %v773 = vpack.c.b16 %v763, %v762
        %v774 = vpack.c.b16 %v765, %v764
        %v775 = vpack.c.b16 %v767, %v766
        %784 = vmatprep.subr.bf16.mxu0 0
        %785 = vmatpush1.bf16.msra.mxu0 %v768
        %786 = vmatprep.subr.bf16.mxu0 0
        %787 = vmatpush1.bf16.msra.mxu0 %v769
        %788 = vmatprep.subr.bf16.mxu0 0
        %789 = vmatpush1.bf16.msra.mxu0 %v770
        %790 = vmatprep.subr.bf16.mxu0 0
        %791 = vmatpush1.bf16.msra.mxu0 %v771
        %792 = vmatprep.subr.bf16.mxu0 0
        %793 = vmatpush1.bf16.msra.mxu0 %v772
        %794 = vmatprep.subr.bf16.mxu0 0
        %795 = vmatpush1.bf16.msra.mxu0 %v773
        %796 = vmatprep.subr.bf16.mxu0 0
        %797 = vmatpush1.bf16.msra.mxu0 %v774
        %798 = vmatprep.subr.bf16.mxu0 0
        %799 = vmatpush1.bf16.msra.mxu0 %v775
        %800 = vmatprep.subr.bf16.mxu0 0
        %801 = vmatpush1.bf16.msra.mxu0 0
        %802 = vmatprep.subr.bf16.mxu0 0
        %803 = vmatpush1.bf16.msra.mxu0 0
        %804 = vmatprep.subr.bf16.mxu0 0
        %805 = vmatpush1.bf16.msra.mxu0 0
        %806 = vmatprep.subr.bf16.mxu0 0
        %807 = vmatpush1.bf16.msra.mxu0 0
        %808 = vmatprep.subr.bf16.mxu0 0
        %809 = vmatpush1.bf16.msra.mxu0 0
        %810 = vmatprep.subr.bf16.mxu0 0
        %811 = vmatpush1.bf16.msra.mxu0 0
        %812 = vmatprep.subr.bf16.mxu0 0
        %813 = vmatpush1.bf16.msra.mxu0 0
        %814 = vmatprep.subr.bf16.mxu0 0
        %815 = vmatpush1.bf16.msra.mxu0 0
        %816 = vmatprep.mubr.bf16.mxu0 0
        %817 = vmatmul.mubr.bf16.gmra.mrb[0].mxu0 %v712
        %v818 = vpop.f32.mrb[0].mxu0
        %v819 = vadd.f32 %v734, %v818
        %v820 = vpop.f32.mrb[0].mxu0
        %v821 = vpop.f32.mrb[0].mxu0
        %v822 = vadd.f32 %v734, %v821
        %v823 = vpop.f32.mrb[0].mxu0
        %824 = vdwg.mxu0
        %v825 = vmax.f32 %v819, 0.0
        %v826 = vmax.f32 %v822, 0.0
        %v827 = vpack.c.bf16 %v826, %v825
        %v828 = vld [vmem:[#allocation10] sm:$0xf]
        %v829 = vld [vmem:[#allocation10 + $0x4] sm:$0xf]
        %v830 = vld [vmem:[#allocation10 + $0x8] sm:$0xf]
        %v831 = vld [vmem:[#allocation10 + $0xc] sm:$0xf]
        %v832 = vld [vmem:[#allocation10 + $0x10] sm:$0xf]
        %v833 = vld [vmem:[#allocation10 + $0x14] sm:$0xf]
        %v834 = vld [vmem:[#allocation10 + $0x18] sm:$0xf]
        %v835 = vld [vmem:[#allocation10 + $0x1c] sm:$0xf]
        %v836 = vld [vmem:[#allocation10 + $0x20] sm:$0xf]
        %v837 = vld [vmem:[#allocation10 + $0x24] sm:$0xf]
        %v838 = vld [vmem:[#allocation10 + $0x28] sm:$0xf]
        %v839 = vld [vmem:[#allocation10 + $0x2c] sm:$0xf]
        %v840 = vld [vmem:[#allocation10 + $0x30] sm:$0xf]
        %v841 = vld [vmem:[#allocation10 + $0x34] sm:$0xf]
        %v842 = vld [vmem:[#allocation10 + $0x38] sm:$0xf]
        %v843 = vld [vmem:[#allocation10 + $0x3c] sm:$0xf]
        %v844 = vld [vmem:[%s8] sm:$0x1]
        %v846 = vlaneseq
        %v847 = vshrl.u32 %v846, 7
        %v848 = vsub.s32 0, %v847
        %v849 = vrot.slane %v844, %v848
        %v867 = vunpack.c.l.b16 %v828
        %v868 = vunpack.c.l.b16 %v829
        %v869 = vunpack.c.l.b16 %v830
        %v870 = vunpack.c.l.b16 %v831
        %v871 = vunpack.c.l.b16 %v832
        %v872 = vunpack.c.l.b16 %v833
        %v873 = vunpack.c.l.b16 %v834
        %v874 = vunpack.c.l.b16 %v835
        %v875 = vunpack.c.l.b16 %v836
        %v876 = vunpack.c.l.b16 %v837
        %v877 = vunpack.c.l.b16 %v838
        %v878 = vunpack.c.l.b16 %v839
        %v879 = vunpack.c.l.b16 %v840
        %v880 = vunpack.c.l.b16 %v841
        %v881 = vunpack.c.l.b16 %v842
        %v882 = vunpack.c.l.b16 %v843
        %v883 = vpack.c.b16 %v868, %v867
        %v884 = vpack.c.b16 %v870, %v869
        %v885 = vpack.c.b16 %v872, %v871
        %v886 = vpack.c.b16 %v874, %v873
        %v887 = vpack.c.b16 %v876, %v875
        %v888 = vpack.c.b16 %v878, %v877
        %v889 = vpack.c.b16 %v880, %v879
        %v890 = vpack.c.b16 %v882, %v881
        %899 = vmatprep.subr.bf16.mxu0 0
        %900 = vmatpush1.bf16.msra.mxu0 %v883
        %901 = vmatprep.subr.bf16.mxu0 0
        %902 = vmatpush1.bf16.msra.mxu0 %v884
        %903 = vmatprep.subr.bf16.mxu0 0
        %904 = vmatpush1.bf16.msra.mxu0 %v885
        %905 = vmatprep.subr.bf16.mxu0 0
        %906 = vmatpush1.bf16.msra.mxu0 %v886
        %907 = vmatprep.subr.bf16.mxu0 0
        %908 = vmatpush1.bf16.msra.mxu0 %v887
        %909 = vmatprep.subr.bf16.mxu0 0
        %910 = vmatpush1.bf16.msra.mxu0 %v888
        %911 = vmatprep.subr.bf16.mxu0 0
        %912 = vmatpush1.bf16.msra.mxu0 %v889
        %913 = vmatprep.subr.bf16.mxu0 0
        %914 = vmatpush1.bf16.msra.mxu0 %v890
        %915 = vmatprep.subr.bf16.mxu0 0
        %916 = vmatpush1.bf16.msra.mxu0 0
        %917 = vmatprep.subr.bf16.mxu0 0
        %918 = vmatpush1.bf16.msra.mxu0 0
        %919 = vmatprep.subr.bf16.mxu0 0
        %920 = vmatpush1.bf16.msra.mxu0 0
        %921 = vmatprep.subr.bf16.mxu0 0
        %922 = vmatpush1.bf16.msra.mxu0 0
        %923 = vmatprep.subr.bf16.mxu0 0
        %924 = vmatpush1.bf16.msra.mxu0 0
        %925 = vmatprep.subr.bf16.mxu0 0
        %926 = vmatpush1.bf16.msra.mxu0 0
        %927 = vmatprep.subr.bf16.mxu0 0
        %928 = vmatpush1.bf16.msra.mxu0 0
        %929 = vmatprep.subr.bf16.mxu0 0
        %930 = vmatpush1.bf16.msra.mxu0 0
        %931 = vmatprep.mubr.bf16.mxu0 0
        %932 = vmatmul.mubr.bf16.gmra.mrb[0].mxu0 %v827
        %v933 = vpop.f32.mrb[0].mxu0
        %v934 = vadd.f32 %v849, %v933
        %v935 = vpop.f32.mrb[0].mxu0
        %v936 = vpop.f32.mrb[0].mxu0
        %v937 = vadd.f32 %v849, %v936
        %v938 = vpop.f32.mrb[0].mxu0
        %939 = vdwg.mxu0
        %v940 = vpack.c.bf16 %v937, %v934
        %v942 = vunpack.c.l.b16 %v940
        %v943 = vunpack.c.h.b16 %v940
        %v944 = vpack.c.b16 %v942, %v942
        %v945 = vpack.c.b16 %v943, %v943
        %948 = vst [vmem:[%s409] sm:$0xf] %v944
        %949 = vst [vmem:[%s409 + $0x4] sm:$0xf] %v945
        %s950 = sand.u32 %s230, 1
        %s951 = scalar_lea.sflag [#allocation4], %s950
        %s952 = sand.u32 %s230, 1
        %s953 = smul.addr %s952, 8
        %s954 = scalar_lea.vmem [#allocation11], %s953
        // Predicated region
        $region77: #{tpu_custom_call.1} parent=55 // pred_check
          %p955 = pneg %p240
        $region78: #{tpu_custom_call.1} parent=55 // pred_check_branch
          %957 = sbr.rel (%p955) target = $region80
        $region79: #{tpu_custom_call.1} parent=55 // pred_region
          %s958 = smul.u32 2, %s28
          %s960 = ssub.s32 128, 128
          %961 = vsyncadd %s951, %s960
          %s962 = smul.addr %s958, 64
          %s963 = scalar_lea.hbm %s9, %s962
          %s964 = sshll.u32 %s954, 4
          %s965 = int_to_ptr.vmem [resolvable:$true] %s964
          %970 = dma.vmem_to_hbm [thread:$0]  %s965, 128, %s963, %s951, 64, 64, 4
        $region80: #{tpu_custom_call.1} parent=55 // pred_fallthru
          _
      $region56: #{tpu_custom_call.1} parent=5 // pred_fallthru
        _
      %p971 = scmp.le.s32.totalorder 2, %s23
      // Predicated region
      $region81: #{tpu_custom_call.1} parent=5 // pred_check
        %p972 = pneg %p971
      $region82: #{tpu_custom_call.1} parent=5 // pred_check_branch
        %974 = sbr.rel (%p972) target = $region84
      $region83: #{tpu_custom_call.1} parent=5 // pred_region
        %s975 = ssub.s32 %s23, 2
        // Predicated region
        $region85: #{tpu_custom_call.1} parent=83 // pred_check
          %p976 = pneg %p246
        $region86: #{tpu_custom_call.1} parent=83 // pred_check_branch
          %978 = sbr.rel (%p976) target = $region88
        $region87: #{tpu_custom_call.1} parent=83 // pred_region
          %s979 = sand.u32 %s231, 1
          %s980 = scalar_lea.sflag [#allocation4], %s979
          %s981 = sand.u32 %s231, 1
          %s982 = smul.addr %s981, 8
          %s983 = scalar_lea.vmem [#allocation11], %s982
          %984 = dma.done %s980, 128
        $region88: #{tpu_custom_call.1} parent=83 // pred_fallthru
          _
      $region84: #{tpu_custom_call.1} parent=5 // pred_fallthru
        _
    $region6: #{tpu_custom_call.1} parent=1 // loop_footer
      %s27 = sadd.s32 1, %s23
    $region7: #{tpu_custom_call.1} parent=1 // loop_footer_branch
      %22 = sbr.rel target = $region3
    $region8: #{tpu_custom_call.1} parent=1 // loop_exit
      _
    %985 = vsyncpa [#allocation3], 1
    %s986 = scalar_lea.sflag [#allocation3], 1
    %987 = vsyncpa %s986, 1
    %988 = vsyncpa [#allocation6], 1
    %989 = vsyncpa [#allocation9], 1
    %990 = vsyncpa [#allocation4], 1
    %s991 = scalar_lea.sflag [#allocation4], 1
    %992 = vsyncpa %s991, 1

</llo_original>
